<compile_context>
chip_gen: v7x
topology: tpu7x:2x2x1
jax: 0.10.0
libtpu: 0.0.40
codegen_flags: <defaults>
</compile_context>

<pallas_src>
import functools
import math

import jax
import jax.numpy as jnp
from jax.experimental import pallas as pl
from jax.experimental.pallas import tpu as pltpu


def _mha_kernel(x_ref, wqkv_ref, bqkv_ref, ws_ref, bs_ref, o_ref, *,
                n_heads, head_dim, scale):
    """One batch element of MultiAttentionHead (all heads fused)."""
    H, E = n_heads, head_dim

    x = x_ref[0]                                              # (S, E) bf16

    # Fused Q/K/V projection for all heads: one lane-dense MXU matmul
    # (S, E) @ (E, 3*H*E) -> (S, 3*H*E); accumulate + bias in f32.
    qkv = jnp.dot(x, wqkv_ref[...],
                  preferred_element_type=jnp.float32) + bqkv_ref[...]

    head_outs = []
    for h in range(H):                                        # H small, unrolled
        q = qkv[:, h * E:(h + 1) * E]                         # (S, E) f32
        k = qkv[:, (H + h) * E:(H + h + 1) * E]
        v = qkv[:, (2 * H + h) * E:(2 * H + h + 1) * E]

        # scores = q @ k.T : contract feature axis of both (no in-kernel .T).
        s = jax.lax.dot_general(
            q.astype(jnp.bfloat16), k.astype(jnp.bfloat16),
            dimension_numbers=(((1,), (1,)), ((), ())),
            preferred_element_type=jnp.float32) * scale       # (S, S) f32
        # TODO(synk): event_lengths masking (masked_fill with -1e9) is not
        # implemented; only the event_lengths=None path is supported.

        # Numerically stable softmax in f32; divide -> EUP reciprocal + mul.
        m = jnp.max(s, axis=-1, keepdims=True)
        e = jnp.exp(s - m)
        p = e * pl.reciprocal(jnp.sum(e, axis=-1, keepdims=True), approx=True)
        # TODO(synk): nn.Dropout on attention weights / module output is an
        # inference-time no-op.

        head_outs.append(
            jnp.dot(p.astype(jnp.bfloat16), v.astype(jnp.bfloat16),
                    preferred_element_type=jnp.float32).astype(jnp.bfloat16))

    # summarize: concat(heads) @ Ws.T as ONE (S, H*E) @ (H*E, E) matmul,
    # contraction dim H*E = 128 (MXU-native width). Bias added in f32.
    cat = jnp.concatenate(head_outs, axis=-1)                 # (S, H*E) bf16
    out = jnp.dot(cat, ws_ref[...],
                  preferred_element_type=jnp.float32) + bs_ref[...]
    o_ref[0] = out.astype(o_ref.dtype)


def multi_attention_head(x, wq, bq, wk, bk, wv, bv, ws, bs):
    """Equivalent of MultiAttentionHead.forward(x) in eval mode.

    x:  (B, S, E)
    wq/wk/wv: (H, E, E)  per-head nn.Linear weights in PyTorch (out, in) layout
    bq/bk/bv: (H, E)     per-head biases
    ws: (E, H*E)         summarize weight (PyTorch layout), bs: (E,)
    """
    B, S, E = x.shape
    H = wq.shape[0]
    assert wq.shape == (H, E, E) and wk.shape == (H, E, E) and wv.shape == (H, E, E)
    assert ws.shape == (E, H * E)

    # --- one-time weight fusion / transposition in the wrapper -------------
    # Per-head PyTorch weight W is (out, in); x @ W.T needs (in, out) columns.
    def to_cols(w):                       # (H, E_out, E_in) -> (E_in, H*E_out)
        return jnp.transpose(w, (2, 0, 1)).reshape(E, H * E)

    wqkv = jnp.concatenate([to_cols(wq), to_cols(wk), to_cols(wv)],
                           axis=1).astype(jnp.bfloat16)        # (E, 3*H*E)
    bqkv = jnp.concatenate([bq.reshape(-1), bk.reshape(-1), bv.reshape(-1)]
                           ).reshape(1, 3 * H * E).astype(jnp.float32)
    ws_t = jnp.transpose(ws).astype(jnp.bfloat16)              # (H*E, E)
    bs2 = bs.reshape(1, E).astype(jnp.float32)

    kernel = functools.partial(_mha_kernel, n_heads=H, head_dim=E,
                               scale=1.0 / math.sqrt(E))

    resident2d = lambda shape: pl.BlockSpec(shape, lambda b: (0, 0))

    return pl.pallas_call(
        kernel,
        out_shape=jax.ShapeDtypeStruct((B, S, E), x.dtype),
        grid=(B,),
        in_specs=[
            pl.BlockSpec((1, S, E), lambda b: (b, 0, 0)),       # x (bf16)
            resident2d((E, 3 * H * E)),                         # fused QKV weight
            resident2d((1, 3 * H * E)),                         # fused QKV bias
            resident2d((H * E, E)),                             # summarize weight
            resident2d((1, E)),                                 # summarize bias
        ],
        out_specs=pl.BlockSpec((1, S, E), lambda b: (b, 0, 0)),
        compiler_params=pltpu.CompilerParams(
            dimension_semantics=("parallel",)),
    )(x.astype(jnp.bfloat16), wqkv, bqkv, ws_t, bs2)


if __name__ == "__main__":
    # Small shapes consistent with the module.
    B, S, E, H = 2, 8, 32, 4

    key = jax.random.PRNGKey(0)
    keys = jax.random.split(key, 9)
    bound = 1.0 / math.sqrt(E)
    bound_s = 1.0 / math.sqrt(E * H)

    x = jax.random.normal(keys[0], (B, S, E), dtype=jnp.float32)
    wq = jax.random.uniform(keys[1], (H, E, E), minval=-bound, maxval=bound,
                            dtype=jnp.float32)
    wk = jax.random.uniform(keys[2], (H, E, E), minval=-bound, maxval=bound,
                            dtype=jnp.float32)
    wv = jax.random.uniform(keys[3], (H, E, E), minval=-bound, maxval=bound,
                            dtype=jnp.float32)
    bq = jax.random.uniform(keys[4], (H, E), minval=-bound, maxval=bound,
                            dtype=jnp.float32)
    bk = jax.random.uniform(keys[5], (H, E), minval=-bound, maxval=bound,
                            dtype=jnp.float32)
    bv = jax.random.uniform(keys[6], (H, E), minval=-bound, maxval=bound,
                            dtype=jnp.float32)
    ws = jax.random.uniform(keys[7], (E, H * E), minval=-bound_s, maxval=bound_s,
                            dtype=jnp.float32)
    bs = jax.random.uniform(keys[8], (E,), minval=-bound_s, maxval=bound_s,
                            dtype=jnp.float32)

    out = multi_attention_head(x, wq, bq, wk, bk, wv, bv, ws, bs)
    out = jax.block_until_ready(out)

    # Pure-JAX f32 reference (eval mode: dropout identity, event_lengths=None).
    def reference(x):
        heads = []
        for h in range(H):
            q = x @ wq[h].T + bq[h]
            k = x @ wk[h].T + bk[h]
            v = x @ wv[h].T + bv[h]
            scores = jnp.einsum("bqe,bke->bqk", q, k) / math.sqrt(E)
            p = jax.nn.softmax(scores, axis=-1)
            heads.append(jnp.einsum("bqk,bke->bqe", p, v))
        cat = jnp.concatenate(heads, axis=-1)
        return cat @ ws.T + bs

    ref = reference(x)
    assert out.shape == (B, S, E)
    # bf16 MXU operands + approx reciprocal => loose-ish tolerance.
    assert jnp.allclose(out, ref, atol=2e-2, rtol=2e-2)

    print("KERNEL_OK")
</pallas_src>

<mosaic_0001>
module attributes {stable_mosaic.version = 11 : i64} {
  func.func @_mha_kernel(%arg0: i32, %arg1: memref<1x8x32xbf16, #tpu.memory_space<vmem>>, %arg2: memref<32x384xbf16, #tpu.memory_space<vmem>>, %arg3: memref<1x384xf32, #tpu.memory_space<vmem>>, %arg4: memref<128x32xbf16, #tpu.memory_space<vmem>>, %arg5: memref<1x32xf32, #tpu.memory_space<vmem>>, %arg6: memref<1x8x32xf32, #tpu.memory_space<vmem>>) attributes {dimension_semantics = [#tpu.dimension_semantics<parallel>], iteration_bounds = array<i64: 2>, scalar_prefetch = 0 : i64, scratch_operands = 0 : i64, tpu.core_type = #tpu.core_type<tc>, window_params = [{transform_indices = @transform_0, window_bounds = array<i64: 1, 8, 32>}, {pipeline_mode = #tpu.pipeline_mode<synchronous>, transform_indices = @transform_1, window_bounds = array<i64: 32, 384>}, {pipeline_mode = #tpu.pipeline_mode<synchronous>, transform_indices = @transform_2, window_bounds = array<i64: 1, 384>}, {pipeline_mode = #tpu.pipeline_mode<synchronous>, transform_indices = @transform_3, window_bounds = array<i64: 128, 32>}, {pipeline_mode = #tpu.pipeline_mode<synchronous>, transform_indices = @transform_4, window_bounds = array<i64: 1, 32>}, {transform_indices = @transform_5, window_bounds = array<i64: 1, 8, 32>}]} {
    %c0 = arith.constant 0 : index
    %c0_0 = arith.constant 0 : index
    %c0_1 = arith.constant 0 : index
    %0 = vector.load %arg1[%c0, %c0_0, %c0_1] : memref<1x8x32xbf16, #tpu.memory_space<vmem>>, vector<1x8x32xbf16>
    %1 = vector.shape_cast %0 : vector<1x8x32xbf16> to vector<8x32xbf16>
    %c0_2 = arith.constant 0 : index
    %c0_3 = arith.constant 0 : index
    %2 = vector.load %arg2[%c0_2, %c0_3] : memref<32x384xbf16, #tpu.memory_space<vmem>>, vector<32x384xbf16>
    %cst = arith.constant dense<0.000000e+00> : vector<8x384xf32>
    %3 = tpu.matmul %1, %2, %cst {dimension_numbers = #tpu.dot_dimension_numbers<[1], [0], [0], [1], [0, 0, 1, 1], [], []>} : vector<8x32xbf16>, vector<32x384xbf16>, vector<8x384xf32> -> vector<8x384xf32>
    %c0_4 = arith.constant 0 : index
    %c0_5 = arith.constant 0 : index
    %4 = vector.load %arg3[%c0_4, %c0_5] : memref<1x384xf32, #tpu.memory_space<vmem>>, vector<1x384xf32>
    %5 = vector.broadcast %4 : vector<1x384xf32> to vector<8x384xf32>
    %6 = arith.addf %3, %5 : vector<8x384xf32>
    %7 = vector.extract_strided_slice %6 {offsets = [0, 0], sizes = [8, 32], strides = [1, 1]} : vector<8x384xf32> to vector<8x32xf32>
    %8 = vector.extract_strided_slice %6 {offsets = [0, 128], sizes = [8, 32], strides = [1, 1]} : vector<8x384xf32> to vector<8x32xf32>
    %9 = vector.extract_strided_slice %6 {offsets = [0, 256], sizes = [8, 32], strides = [1, 1]} : vector<8x384xf32> to vector<8x32xf32>
    %10 = arith.truncf %7 : vector<8x32xf32> to vector<8x32xbf16>
    %11 = arith.truncf %8 : vector<8x32xf32> to vector<8x32xbf16>
    %cst_6 = arith.constant dense<0.000000e+00> : vector<8x8xf32>
    %12 = tpu.matmul %10, %11, %cst_6 {dimension_numbers = #tpu.dot_dimension_numbers<[1], [1], [0], [0], [0, 0, 1, 0], [], []>} : vector<8x32xbf16>, vector<8x32xbf16>, vector<8x8xf32> -> vector<8x8xf32>
    %cst_7 = arith.constant 0.176776692 : f32
    %13 = vector.broadcast %cst_7 : f32 to vector<8x8xf32>
    %14 = arith.mulf %12, %13 : vector<8x8xf32>
    %cst_8 = arith.constant dense<0xFF800000> : vector<8xf32>
    %15 = vector.multi_reduction <maximumf>, %14, %cst_8 [1] : vector<8x8xf32> to vector<8xf32>
    %16 = vector.shape_cast %15 : vector<8xf32> to vector<8x1xf32>
    %17 = vector.broadcast %16 : vector<8x1xf32> to vector<8x8xf32>
    %18 = arith.subf %14, %17 : vector<8x8xf32>
    %19 = math.exp %18 : vector<8x8xf32>
    %cst_9 = arith.constant dense<0.000000e+00> : vector<8xf32>
    %20 = vector.multi_reduction <add>, %19, %cst_9 [1] : vector<8x8xf32> to vector<8xf32>
    %21 = vector.shape_cast %20 : vector<8xf32> to vector<8x1xf32>
    %22 = tpu.reciprocal %21 {approx = true} : vector<8x1xf32> -> vector<8x1xf32>
    %23 = vector.broadcast %22 : vector<8x1xf32> to vector<8x8xf32>
    %24 = arith.mulf %19, %23 : vector<8x8xf32>
    %25 = arith.truncf %24 : vector<8x8xf32> to vector<8x8xbf16>
    %26 = arith.truncf %9 : vector<8x32xf32> to vector<8x32xbf16>
    %cst_10 = arith.constant dense<0.000000e+00> : vector<8x32xf32>
    %27 = tpu.matmul %25, %26, %cst_10 {dimension_numbers = #tpu.dot_dimension_numbers<[1], [0], [0], [1], [0, 0, 1, 1], [], []>} : vector<8x8xbf16>, vector<8x32xbf16>, vector<8x32xf32> -> vector<8x32xf32>
    %28 = arith.truncf %27 : vector<8x32xf32> to vector<8x32xbf16>
    %29 = vector.extract_strided_slice %6 {offsets = [0, 32], sizes = [8, 32], strides = [1, 1]} : vector<8x384xf32> to vector<8x32xf32>
    %30 = vector.extract_strided_slice %6 {offsets = [0, 160], sizes = [8, 32], strides = [1, 1]} : vector<8x384xf32> to vector<8x32xf32>
    %31 = vector.extract_strided_slice %6 {offsets = [0, 288], sizes = [8, 32], strides = [1, 1]} : vector<8x384xf32> to vector<8x32xf32>
    %32 = arith.truncf %29 : vector<8x32xf32> to vector<8x32xbf16>
    %33 = arith.truncf %30 : vector<8x32xf32> to vector<8x32xbf16>
    %cst_11 = arith.constant dense<0.000000e+00> : vector<8x8xf32>
    %34 = tpu.matmul %32, %33, %cst_11 {dimension_numbers = #tpu.dot_dimension_numbers<[1], [1], [0], [0], [0, 0, 1, 0], [], []>} : vector<8x32xbf16>, vector<8x32xbf16>, vector<8x8xf32> -> vector<8x8xf32>
    %cst_12 = arith.constant 0.176776692 : f32
    %35 = vector.broadcast %cst_12 : f32 to vector<8x8xf32>
    %36 = arith.mulf %34, %35 : vector<8x8xf32>
    %cst_13 = arith.constant dense<0xFF800000> : vector<8xf32>
    %37 = vector.multi_reduction <maximumf>, %36, %cst_13 [1] : vector<8x8xf32> to vector<8xf32>
    %38 = vector.shape_cast %37 : vector<8xf32> to vector<8x1xf32>
    %39 = vector.broadcast %38 : vector<8x1xf32> to vector<8x8xf32>
    %40 = arith.subf %36, %39 : vector<8x8xf32>
    %41 = math.exp %40 : vector<8x8xf32>
    %cst_14 = arith.constant dense<0.000000e+00> : vector<8xf32>
    %42 = vector.multi_reduction <add>, %41, %cst_14 [1] : vector<8x8xf32> to vector<8xf32>
    %43 = vector.shape_cast %42 : vector<8xf32> to vector<8x1xf32>
    %44 = tpu.reciprocal %43 {approx = true} : vector<8x1xf32> -> vector<8x1xf32>
    %45 = vector.broadcast %44 : vector<8x1xf32> to vector<8x8xf32>
    %46 = arith.mulf %41, %45 : vector<8x8xf32>
    %47 = arith.truncf %46 : vector<8x8xf32> to vector<8x8xbf16>
    %48 = arith.truncf %31 : vector<8x32xf32> to vector<8x32xbf16>
    %cst_15 = arith.constant dense<0.000000e+00> : vector<8x32xf32>
    %49 = tpu.matmul %47, %48, %cst_15 {dimension_numbers = #tpu.dot_dimension_numbers<[1], [0], [0], [1], [0, 0, 1, 1], [], []>} : vector<8x8xbf16>, vector<8x32xbf16>, vector<8x32xf32> -> vector<8x32xf32>
    %50 = arith.truncf %49 : vector<8x32xf32> to vector<8x32xbf16>
    %51 = vector.extract_strided_slice %6 {offsets = [0, 64], sizes = [8, 32], strides = [1, 1]} : vector<8x384xf32> to vector<8x32xf32>
    %52 = vector.extract_strided_slice %6 {offsets = [0, 192], sizes = [8, 32], strides = [1, 1]} : vector<8x384xf32> to vector<8x32xf32>
    %53 = vector.extract_strided_slice %6 {offsets = [0, 320], sizes = [8, 32], strides = [1, 1]} : vector<8x384xf32> to vector<8x32xf32>
    %54 = arith.truncf %51 : vector<8x32xf32> to vector<8x32xbf16>
    %55 = arith.truncf %52 : vector<8x32xf32> to vector<8x32xbf16>
    %cst_16 = arith.constant dense<0.000000e+00> : vector<8x8xf32>
    %56 = tpu.matmul %54, %55, %cst_16 {dimension_numbers = #tpu.dot_dimension_numbers<[1], [1], [0], [0], [0, 0, 1, 0], [], []>} : vector<8x32xbf16>, vector<8x32xbf16>, vector<8x8xf32> -> vector<8x8xf32>
    %cst_17 = arith.constant 0.176776692 : f32
    %57 = vector.broadcast %cst_17 : f32 to vector<8x8xf32>
    %58 = arith.mulf %56, %57 : vector<8x8xf32>
    %cst_18 = arith.constant dense<0xFF800000> : vector<8xf32>
    %59 = vector.multi_reduction <maximumf>, %58, %cst_18 [1] : vector<8x8xf32> to vector<8xf32>
    %60 = vector.shape_cast %59 : vector<8xf32> to vector<8x1xf32>
    %61 = vector.broadcast %60 : vector<8x1xf32> to vector<8x8xf32>
    %62 = arith.subf %58, %61 : vector<8x8xf32>
    %63 = math.exp %62 : vector<8x8xf32>
    %cst_19 = arith.constant dense<0.000000e+00> : vector<8xf32>
    %64 = vector.multi_reduction <add>, %63, %cst_19 [1] : vector<8x8xf32> to vector<8xf32>
    %65 = vector.shape_cast %64 : vector<8xf32> to vector<8x1xf32>
    %66 = tpu.reciprocal %65 {approx = true} : vector<8x1xf32> -> vector<8x1xf32>
    %67 = vector.broadcast %66 : vector<8x1xf32> to vector<8x8xf32>
    %68 = arith.mulf %63, %67 : vector<8x8xf32>
    %69 = arith.truncf %68 : vector<8x8xf32> to vector<8x8xbf16>
    %70 = arith.truncf %53 : vector<8x32xf32> to vector<8x32xbf16>
    %cst_20 = arith.constant dense<0.000000e+00> : vector<8x32xf32>
    %71 = tpu.matmul %69, %70, %cst_20 {dimension_numbers = #tpu.dot_dimension_numbers<[1], [0], [0], [1], [0, 0, 1, 1], [], []>} : vector<8x8xbf16>, vector<8x32xbf16>, vector<8x32xf32> -> vector<8x32xf32>
    %72 = arith.truncf %71 : vector<8x32xf32> to vector<8x32xbf16>
    %73 = vector.extract_strided_slice %6 {offsets = [0, 96], sizes = [8, 32], strides = [1, 1]} : vector<8x384xf32> to vector<8x32xf32>
    %74 = vector.extract_strided_slice %6 {offsets = [0, 224], sizes = [8, 32], strides = [1, 1]} : vector<8x384xf32> to vector<8x32xf32>
    %75 = vector.extract_strided_slice %6 {offsets = [0, 352], sizes = [8, 32], strides = [1, 1]} : vector<8x384xf32> to vector<8x32xf32>
    %76 = arith.truncf %73 : vector<8x32xf32> to vector<8x32xbf16>
    %77 = arith.truncf %74 : vector<8x32xf32> to vector<8x32xbf16>
    %cst_21 = arith.constant dense<0.000000e+00> : vector<8x8xf32>
    %78 = tpu.matmul %76, %77, %cst_21 {dimension_numbers = #tpu.dot_dimension_numbers<[1], [1], [0], [0], [0, 0, 1, 0], [], []>} : vector<8x32xbf16>, vector<8x32xbf16>, vector<8x8xf32> -> vector<8x8xf32>
    %cst_22 = arith.constant 0.176776692 : f32
    %79 = vector.broadcast %cst_22 : f32 to vector<8x8xf32>
    %80 = arith.mulf %78, %79 : vector<8x8xf32>
    %cst_23 = arith.constant dense<0xFF800000> : vector<8xf32>
    %81 = vector.multi_reduction <maximumf>, %80, %cst_23 [1] : vector<8x8xf32> to vector<8xf32>
    %82 = vector.shape_cast %81 : vector<8xf32> to vector<8x1xf32>
    %83 = vector.broadcast %82 : vector<8x1xf32> to vector<8x8xf32>
    %84 = arith.subf %80, %83 : vector<8x8xf32>
    %85 = math.exp %84 : vector<8x8xf32>
    %cst_24 = arith.constant dense<0.000000e+00> : vector<8xf32>
    %86 = vector.multi_reduction <add>, %85, %cst_24 [1] : vector<8x8xf32> to vector<8xf32>
    %87 = vector.shape_cast %86 : vector<8xf32> to vector<8x1xf32>
    %88 = tpu.reciprocal %87 {approx = true} : vector<8x1xf32> -> vector<8x1xf32>
    %89 = vector.broadcast %88 : vector<8x1xf32> to vector<8x8xf32>
    %90 = arith.mulf %85, %89 : vector<8x8xf32>
    %91 = arith.truncf %90 : vector<8x8xf32> to vector<8x8xbf16>
    %92 = arith.truncf %75 : vector<8x32xf32> to vector<8x32xbf16>
    %cst_25 = arith.constant dense<0.000000e+00> : vector<8x32xf32>
    %93 = tpu.matmul %91, %92, %cst_25 {dimension_numbers = #tpu.dot_dimension_numbers<[1], [0], [0], [1], [0, 0, 1, 1], [], []>} : vector<8x8xbf16>, vector<8x32xbf16>, vector<8x32xf32> -> vector<8x32xf32>
    %94 = arith.truncf %93 : vector<8x32xf32> to vector<8x32xbf16>
    %95 = tpu.concatenate %28, %50, %72, %94 in 1 : vector<8x32xbf16>, vector<8x32xbf16>, vector<8x32xbf16>, vector<8x32xbf16> -> vector<8x128xbf16>
    %c0_26 = arith.constant 0 : index
    %c0_27 = arith.constant 0 : index
    %96 = vector.load %arg4[%c0_26, %c0_27] : memref<128x32xbf16, #tpu.memory_space<vmem>>, vector<128x32xbf16>
    %cst_28 = arith.constant dense<0.000000e+00> : vector<8x32xf32>
    %97 = tpu.matmul %95, %96, %cst_28 {dimension_numbers = #tpu.dot_dimension_numbers<[1], [0], [0], [1], [0, 0, 1, 1], [], []>} : vector<8x128xbf16>, vector<128x32xbf16>, vector<8x32xf32> -> vector<8x32xf32>
    %c0_29 = arith.constant 0 : index
    %c0_30 = arith.constant 0 : index
    %98 = vector.load %arg5[%c0_29, %c0_30] : memref<1x32xf32, #tpu.memory_space<vmem>>, vector<1x32xf32>
    %99 = vector.broadcast %98 : vector<1x32xf32> to vector<8x32xf32>
    %100 = arith.addf %97, %99 : vector<8x32xf32>
    %c0_31 = arith.constant 0 : index
    %c0_32 = arith.constant 0 : index
    %c0_33 = arith.constant 0 : index
    %101 = vector.load %arg6[%c0_31, %c0_32, %c0_33] : memref<1x8x32xf32, #tpu.memory_space<vmem>>, vector<1x8x32xf32>
    %102 = vector.shape_cast %101 : vector<1x8x32xf32> to vector<8x32xf32>
    %103 = vector.shape_cast %100 : vector<8x32xf32> to vector<1x8x32xf32>
    tpu.vector_store %arg6[%c0_31, %c0_32, %c0_33], %103 {strides = array<i32>} : memref<1x8x32xf32, #tpu.memory_space<vmem>>, vector<1x8x32xf32>,
    return
  }
  func.func @transform_0(%arg0: i32) -> (i32, i32, i32) {
    %c0_i32 = arith.constant 0 : i32
    %c0_i32_0 = arith.constant 0 : i32
    %c0_i32_1 = arith.constant 0 : i32
    return %arg0, %c0_i32, %c0_i32_0 : i32, i32, i32
  }
  func.func @transform_1(%arg0: i32) -> (i32, i32) {
    %c0_i32 = arith.constant 0 : i32
    %c0_i32_0 = arith.constant 0 : i32
    %c0_i32_1 = arith.constant 0 : i32
    return %c0_i32, %c0_i32_0 : i32, i32
  }
  func.func @transform_2(%arg0: i32) -> (i32, i32) {
    %c0_i32 = arith.constant 0 : i32
    %c0_i32_0 = arith.constant 0 : i32
    %c0_i32_1 = arith.constant 0 : i32
    return %c0_i32, %c0_i32_0 : i32, i32
  }
  func.func @transform_3(%arg0: i32) -> (i32, i32) {
    %c0_i32 = arith.constant 0 : i32
    %c0_i32_0 = arith.constant 0 : i32
    %c0_i32_1 = arith.constant 0 : i32
    return %c0_i32, %c0_i32_0 : i32, i32
  }
  func.func @transform_4(%arg0: i32) -> (i32, i32) {
    %c0_i32 = arith.constant 0 : i32
    %c0_i32_0 = arith.constant 0 : i32
    %c0_i32_1 = arith.constant 0 : i32
    return %c0_i32, %c0_i32_0 : i32, i32
  }
  func.func @transform_5(%arg0: i32) -> (i32, i32, i32) {
    %c0_i32 = arith.constant 0 : i32
    %c0_i32_0 = arith.constant 0 : i32
    %c0_i32_1 = arith.constant 0 : i32
    return %arg0, %c0_i32, %c0_i32_0 : i32, i32, i32
  }
}

</mosaic_0001>

<llo_original>
// kernel: tpu_custom_call.1
$region0: #{tpu_custom_call.1}
  #allocation0 [shape = 'u32[]', space=smem, size = 0x4, offset = 0x4, fixed_abs, tag = 'smem constant byte address 0x4 - core index']
  #allocation1 [shape = 'u32[144,128]{1,0:T(1,128)}', space=vmem, size = 0x12000, scoped, tag = 'internal scratch']
  %s0 = inlined_call_operand.vmem [shape: bf16[2,8,32], index: 0, kind: input, shape index: {}]
  %s1 = inlined_call_operand.vmem [shape: bf16[32,384], index: 1, kind: input, shape index: {}]
  %s2 = inlined_call_operand.vmem [shape: f32[1,384], index: 2, kind: input, shape index: {}]
  %s3 = inlined_call_operand.vmem [shape: bf16[128,32], index: 3, kind: input, shape index: {}]
  %s4 = inlined_call_operand.vmem [shape: f32[1,32], index: 4, kind: input, shape index: {}]
  %s5 = inlined_call_operand.hbm [shape: f32[2,8,32], index: 5, kind: output, shape index: {}]
  %s6 = sld [smem:[#allocation0]]
  $region53: #{tpu_custom_call.1} parent=0
    _
  %s8 = ssub.s32 1, %s6
  %s9 = scalar_select 0, %s8, %s6
  $region1: #{tpu_custom_call.1} parent=0
    #allocation2 [shape = 'u8[8192]{0}', space=vmem, size = 0x2000, scoped, tag = 'output window, operand 0']
    #allocation3 [shape = 's32[2]{0}', space=sflag, size = 0x8, scoped, tag = 'scoped memory for tpu_custom_call.1']
    %10 = vsyncpa [#allocation3], 0
    %s11 = scalar_lea.sflag [#allocation3], 1
    %12 = vsyncpa %s11, 0
    loop: start=0, step=1, limit=4
    $region2: #{tpu_custom_call.1} parent=1 // loop_pre_header
      _
    $region3: #{tpu_custom_call.1} parent=1 // loop_header
      %s14 = sphi 0, %s18
      %p15 = scmp.ge.s32.totalorder %s14, 4
      %s24 = sphi 0, %s26
      %s27 = sphi 0, %s24
      %s28 = sphi 0, %s27
      %s44 = sphi 0, %s28
      %s48 = sphi 0, %s48
      %s50 = sphi 0, %s48
      %s51 = sphi 0, %s50
      %s65 = sphi 0, %s51
      %s69 = sphi 0, %s69
      %s71 = sphi 0, %s69
      %s72 = sphi 0, %s71
      %s86 = sphi 0, %s72
      %s90 = sphi 0, %s90
      %s92 = sphi 0, %s90
      %s93 = sphi 0, %s92
      %s107 = sphi 0, %s93
      %s111 = sphi 0, %s111
      %s113 = sphi 0, %s111
      %s114 = sphi 0, %s113
      %s128 = sphi 0, %s114
      %s134 = sphi 0, %s136
      %s137 = sphi 0, %s134
      %s138 = sphi 0, %s137
      %s154 = sphi 0, %s138
    $region4: #{tpu_custom_call.1} parent=1 // loop_header_branch
      %17 = sbr.rel (%p15) target = $region8
    $region5: #{tpu_custom_call.1} parent=1 // loop_body
      %s19 = ssub.s32 %s14, 1
      %s20 = ssub.s32 %s14, 2
      %s21 = sadd.s32 %s14, 1
      %s22 = ssub.s32 %s14, %s21
      %p23 = scmp.eq.s32.totalorder %s22, 0
      %s25 = sadd.s32 %s24, 1
      %s26 = scalar_select %p23, %s24, %s25
      %p29 = pneg %p23
      %p30 = scmp.eq.s32.totalorder %s14, 1
      %p31 = por %p29, %p30
      %p32 = scmp.ne.s32.totalorder %s24, %s27
      %p33 = scmp.eq.s32.totalorder %s14, 0
      %p34 = por %p32, %p33
      %p35 = scmp.ne.s32.totalorder %s24, %s27
      %p36 = scmp.eq.s32.totalorder %s19, 1
      %p37 = por %p35, %p36
      %p38 = scmp.ne.s32.totalorder %s27, %s28
      %p39 = scmp.eq.s32.totalorder %s19, 0
      %p40 = por %p38, %p39
      %p41 = scmp.ne.s32.totalorder %s27, %s28
      %p42 = scmp.eq.s32.totalorder %s20, 1
      %p43 = por %p41, %p42
      %p45 = scmp.ne.s32.totalorder %s28, %s44
      %p46 = scmp.eq.s32.totalorder %s20, 0
      %p47 = por %p45, %p46
      %s49 = sadd.s32 %s48, 1
      %p52 = scmp.eq.s32.totalorder %s14, 1
      %p53 = scmp.ne.s32.totalorder %s48, %s50
      %p54 = scmp.eq.s32.totalorder %s14, 0
      %p55 = por %p53, %p54
      %p56 = scmp.ne.s32.totalorder %s48, %s50
      %p57 = scmp.eq.s32.totalorder %s19, 1
      %p58 = por %p56, %p57
      %p59 = scmp.ne.s32.totalorder %s50, %s51
      %p60 = scmp.eq.s32.totalorder %s19, 0
      %p61 = por %p59, %p60
      %p62 = scmp.ne.s32.totalorder %s50, %s51
      %p63 = scmp.eq.s32.totalorder %s20, 1
      %p64 = por %p62, %p63
      %p66 = scmp.ne.s32.totalorder %s51, %s65
      %p67 = scmp.eq.s32.totalorder %s20, 0
      %p68 = por %p66, %p67
      %s70 = sadd.s32 %s69, 1
      %p73 = scmp.eq.s32.totalorder %s14, 1
      %p74 = scmp.ne.s32.totalorder %s69, %s71
      %p75 = scmp.eq.s32.totalorder %s14, 0
      %p76 = por %p74, %p75
      %p77 = scmp.ne.s32.totalorder %s69, %s71
      %p78 = scmp.eq.s32.totalorder %s19, 1
      %p79 = por %p77, %p78
      %p80 = scmp.ne.s32.totalorder %s71, %s72
      %p81 = scmp.eq.s32.totalorder %s19, 0
      %p82 = por %p80, %p81
      %p83 = scmp.ne.s32.totalorder %s71, %s72
      %p84 = scmp.eq.s32.totalorder %s20, 1
      %p85 = por %p83, %p84
      %p87 = scmp.ne.s32.totalorder %s72, %s86
      %p88 = scmp.eq.s32.totalorder %s20, 0
      %p89 = por %p87, %p88
      %s91 = sadd.s32 %s90, 1
      %p94 = scmp.eq.s32.totalorder %s14, 1
      %p95 = scmp.ne.s32.totalorder %s90, %s92
      %p96 = scmp.eq.s32.totalorder %s14, 0
      %p97 = por %p95, %p96
      %p98 = scmp.ne.s32.totalorder %s90, %s92
      %p99 = scmp.eq.s32.totalorder %s19, 1
      %p100 = por %p98, %p99
      %p101 = scmp.ne.s32.totalorder %s92, %s93
      %p102 = scmp.eq.s32.totalorder %s19, 0
      %p103 = por %p101, %p102
      %p104 = scmp.ne.s32.totalorder %s92, %s93
      %p105 = scmp.eq.s32.totalorder %s20, 1
      %p106 = por %p104, %p105
      %p108 = scmp.ne.s32.totalorder %s93, %s107
      %p109 = scmp.eq.s32.totalorder %s20, 0
      %p110 = por %p108, %p109
      %s112 = sadd.s32 %s111, 1
      %p115 = scmp.eq.s32.totalorder %s14, 1
      %p116 = scmp.ne.s32.totalorder %s111, %s113
      %p117 = scmp.eq.s32.totalorder %s14, 0
      %p118 = por %p116, %p117
      %p119 = scmp.ne.s32.totalorder %s111, %s113
      %p120 = scmp.eq.s32.totalorder %s19, 1
      %p121 = por %p119, %p120
      %p122 = scmp.ne.s32.totalorder %s113, %s114
      %p123 = scmp.eq.s32.totalorder %s19, 0
      %p124 = por %p122, %p123
      %p125 = scmp.ne.s32.totalorder %s113, %s114
      %p126 = scmp.eq.s32.totalorder %s20, 1
      %p127 = por %p125, %p126
      %p129 = scmp.ne.s32.totalorder %s114, %s128
      %p130 = scmp.eq.s32.totalorder %s20, 0
      %p131 = por %p129, %p130
      %s132 = ssub.s32 %s14, %s21
      %p133 = scmp.eq.s32.totalorder %s132, 0
      %s135 = sadd.s32 %s134, 1
      %s136 = scalar_select %p133, %s134, %s135
      %p139 = pneg %p133
      %p140 = scmp.eq.s32.totalorder %s14, 1
      %p141 = por %p139, %p140
      %p142 = scmp.ne.s32.totalorder %s134, %s137
      %p143 = scmp.eq.s32.totalorder %s14, 0
      %p144 = por %p142, %p143
      %p145 = scmp.ne.s32.totalorder %s134, %s137
      %p146 = scmp.eq.s32.totalorder %s19, 1
      %p147 = por %p145, %p146
      %p148 = scmp.ne.s32.totalorder %s137, %s138
      %p149 = scmp.eq.s32.totalorder %s19, 0
      %p150 = por %p148, %p149
      %p151 = scmp.ne.s32.totalorder %s137, %s138
      %p152 = scmp.eq.s32.totalorder %s20, 1
      %p153 = por %p151, %p152
      %p155 = scmp.ne.s32.totalorder %s138, %s154
      %p156 = scmp.eq.s32.totalorder %s20, 0
      %p157 = por %p155, %p156
      %p158 = scmp.le.s32.totalorder 1, %s14
      %p159 = scmp.lt.s32.totalorder %s14, 3
      %p160 = pnand %p158, %p159
      %p161 = pneg %p160
      // Predicated region
      $region9: #{tpu_custom_call.1} parent=5 // pred_check
        _
      $region10: #{tpu_custom_call.1} parent=5 // pred_check_branch
        %163 = sbr.rel (%p160) target = $region12
      $region11: #{tpu_custom_call.1} parent=5 // pred_region
        %s164 = ssub.s32 %s14, 1
        // Predicated region
        $region13: #{tpu_custom_call.1} parent=11 // pred_check
          %p165 = pneg %p61
        $region14: #{tpu_custom_call.1} parent=11 // pred_check_branch
          %167 = sbr.rel (%p165) target = $region16
        $region15: #{tpu_custom_call.1} parent=11 // pred_region
          _
        $region16: #{tpu_custom_call.1} parent=11 // pred_fallthru
          _
        // Predicated region
        $region17: #{tpu_custom_call.1} parent=11 // pred_check
          %p168 = pneg %p82
        $region18: #{tpu_custom_call.1} parent=11 // pred_check_branch
          %170 = sbr.rel (%p168) target = $region20
        $region19: #{tpu_custom_call.1} parent=11 // pred_region
          _
        $region20: #{tpu_custom_call.1} parent=11 // pred_fallthru
          _
        // Predicated region
        $region21: #{tpu_custom_call.1} parent=11 // pred_check
          %p171 = pneg %p103
        $region22: #{tpu_custom_call.1} parent=11 // pred_check_branch
          %173 = sbr.rel (%p171) target = $region24
        $region23: #{tpu_custom_call.1} parent=11 // pred_region
          _
        $region24: #{tpu_custom_call.1} parent=11 // pred_fallthru
          _
        // Predicated region
        $region25: #{tpu_custom_call.1} parent=11 // pred_check
          %p174 = pneg %p124
        $region26: #{tpu_custom_call.1} parent=11 // pred_check_branch
          %176 = sbr.rel (%p174) target = $region28
        $region27: #{tpu_custom_call.1} parent=11 // pred_region
          _
        $region28: #{tpu_custom_call.1} parent=11 // pred_fallthru
          _
      $region12: #{tpu_custom_call.1} parent=5 // pred_fallthru
        _
      %p177 = scmp.lt.s32.totalorder %s14, 2
      // Predicated region
      $region29: #{tpu_custom_call.1} parent=5 // pred_check
        %p178 = pneg %p177
      $region30: #{tpu_custom_call.1} parent=5 // pred_check_branch
        %180 = sbr.rel (%p178) target = $region32
      $region31: #{tpu_custom_call.1} parent=5 // pred_region
        // Predicated region
        $region33: #{tpu_custom_call.1} parent=31 // pred_check
          %p181 = pneg %p34
        $region34: #{tpu_custom_call.1} parent=31 // pred_check_branch
          %183 = sbr.rel (%p181) target = $region36
        $region35: #{tpu_custom_call.1} parent=31 // pred_region
          %p184 = scmp.lt.s32.totalorder %s14, 1
          %s185 = scalar_select %p184, %s14, 1
          %s186 = smul.addr %s185, 4
          %s187 = scalar_lea.vmem %s0, %s186
        $region36: #{tpu_custom_call.1} parent=31 // pred_fallthru
          _
      $region32: #{tpu_custom_call.1} parent=5 // pred_fallthru
        _
      %p188 = scmp.le.s32.totalorder 1, %s14
      %p189 = scmp.lt.s32.totalorder %s14, 3
      %p190 = pnand %p188, %p189
      %p191 = pneg %p190
      // Predicated region
      $region37: #{tpu_custom_call.1} parent=5 // pred_check
        _
      $region38: #{tpu_custom_call.1} parent=5 // pred_check_branch
        %193 = sbr.rel (%p190) target = $region40
      $region39: #{tpu_custom_call.1} parent=5 // pred_region
        %s194 = ssub.s32 %s14, 1
        %p195 = scmp.lt.s32.totalorder %s19, 1
        %s196 = scalar_select %p195, %s19, 1
        %s197 = smul.addr %s196, 4
        %s198 = scalar_lea.vmem %s0, %s197
        %p199 = pneg %p40
        %p200 = pneg %p37
        %p201 = pneg %p61
        %p202 = pneg %p58
        %p203 = pneg %p82
        %p204 = pneg %p79
        %p205 = pneg %p103
        %p206 = pneg %p100
        %p207 = pneg %p124
        %p208 = pneg %p121
        %p209 = pneg %p150
        %p210 = pneg %p147
        %s211 = sand.u32 %s137, 1
        %s212 = scalar_lea.sflag [#allocation3], %s211
        %s213 = sand.u32 %s137, 1
        %s214 = smul.addr %s213, 8
        %s215 = scalar_lea.vmem [#allocation2], %s214
        %p216 = scmp.lt.s32.totalorder %s19, 1
        %s217 = scalar_select %p216, %s19, 1
        %s218 = smul.addr %s217, 4
        %s219 = scalar_lea.vmem %s0, %s218
        %v221 = vld [vmem:[%s219] sm:$0xf]
        %v222 = vld [vmem:[%s1] sm:$0xff]
        %v223 = vld [vmem:[%s1 + $0x8] sm:$0xf]
        %v224 = vld [vmem:[%s1 + $0xc] sm:$0xff]
        %v225 = vld [vmem:[%s1 + $0x14] sm:$0xf]
        %v226 = vld [vmem:[%s1 + $0x18] sm:$0xff]
        %v227 = vld [vmem:[%s1 + $0x20] sm:$0xf]
        %v228 = vld [vmem:[%s1 + $0x24] sm:$0xff]
        %v229 = vld [vmem:[%s1 + $0x2c] sm:$0xf]
        %v230 = vld [vmem:[%s2] sm:$0x7]
        %v232 = vlaneseq
        %v233 = vshrl.u32 %v232, 7
        %v234 = vsub.s32 0, %v233
        %v235 = vrot.slane %v230, %v234
        %v236 = vlaneseq
        %v237 = vshrl.u32 %v236, 7
        %v238 = vsub.s32 1, %v237
        %v239 = vrot.slane %v230, %v238
        %v240 = vlaneseq
        %v241 = vshrl.u32 %v240, 7
        %v242 = vsub.s32 2, %v241
        %v243 = vrot.slane %v230, %v242
        %v255 = vunpack.c.l.b16 %v222
        %v256 = vunpack.c.h.b16 %v222
        %v257 = vunpack.c.l.b16 %v223
        %v258 = vunpack.c.l.b16 %v224
        %v259 = vunpack.c.h.b16 %v224
        %v260 = vunpack.c.l.b16 %v225
        %v261 = vunpack.c.l.b16 %v226
        %v262 = vunpack.c.h.b16 %v226
        %v263 = vunpack.c.l.b16 %v227
        %v264 = vunpack.c.l.b16 %v228
        %v265 = vunpack.c.h.b16 %v228
        %v266 = vunpack.c.l.b16 %v229
        %v267 = vpack.c.b16 %v258, %v255
        %v268 = vpack.c.b16 %v259, %v256
        %v269 = vpack.c.b16 %v260, %v257
        %v270 = vpack.c.b16 %v264, %v261
        %v271 = vpack.c.b16 %v265, %v262
        %v272 = vpack.c.b16 %v266, %v263
        %vm279 = vcmask 261120
        %v281 = vsel %vm279, %v221, 0
        %283 = vmatprep.subr.bf16.mxu0 %v268
        %284 = vmatpush1.bf16.msra.mxu0 %v267
        %285 = vmatprep.subr.bf16.mxu0 %v271
        %286 = vmatpush1.bf16.msra.mxu0 %v270
        %287 = vmatprep.subr.bf16.mxu0 0
        %288 = vmatpush1.bf16.msra.mxu0 0
        %289 = vmatprep.subr.bf16.mxu0 0
        %290 = vmatpush1.bf16.msra.mxu0 0
        %291 = vmatprep.subr.bf16.mxu0 0
        %292 = vmatpush1.bf16.msra.mxu0 0
        %293 = vmatprep.subr.bf16.mxu0 0
        %294 = vmatpush1.bf16.msra.mxu0 0
        %295 = vmatprep.subr.bf16.mxu0 0
        %296 = vmatpush1.bf16.msra.mxu0 0
        %297 = vmatprep.subr.bf16.mxu0 0
        %298 = vmatpush1.bf16.msra.mxu0 0
        %299 = vmatprep.subr.bf16.mxu0 0
        %300 = vmatpush1.bf16.msra.mxu0 0
        %301 = vmatprep.subr.bf16.mxu0 0
        %302 = vmatpush1.bf16.msra.mxu0 0
        %303 = vmatprep.subr.bf16.mxu0 0
        %304 = vmatpush1.bf16.msra.mxu0 0
        %305 = vmatprep.subr.bf16.mxu0 0
        %306 = vmatpush1.bf16.msra.mxu0 0
        %307 = vmatprep.subr.bf16.mxu0 0
        %308 = vmatpush1.bf16.msra.mxu0 0
        %309 = vmatprep.subr.bf16.mxu0 0
        %310 = vmatpush1.bf16.msra.mxu0 0
        %311 = vmatprep.subr.bf16.mxu0 0
        %312 = vmatpush1.bf16.msra.mxu0 0
        %313 = vmatprep.subr.bf16.mxu0 0
        %314 = vmatpush1.bf16.msra.mxu0 0
        %315 = vmatprep.mubr.bf16.mxu0 0
        %316 = vmatmul.mubr.bf16.gmra.mrb[0].mxu0 %v281
        %v317 = vpop.f32.mrb[0].mxu0
        %v318 = vadd.f32 %v235, %v317
        %v319 = vpop.f32.mrb[0].mxu0
        %v320 = vadd.f32 %v239, %v319
        %v321 = vpop.f32.mrb[0].mxu0
        %v322 = vpop.f32.mrb[0].mxu0
        %323 = vdwg.mxu0
        %324 = vmatprep.subr.bf16.mxu0 0
        %325 = vmatpush1.bf16.msra.mxu0 %v269
        %326 = vmatprep.subr.bf16.mxu0 0
        %327 = vmatpush1.bf16.msra.mxu0 %v272
        %328 = vmatprep.subr.bf16.mxu0 0
        %329 = vmatpush1.bf16.msra.mxu0 0
        %330 = vmatprep.subr.bf16.mxu0 0
        %331 = vmatpush1.bf16.msra.mxu0 0
        %332 = vmatprep.subr.bf16.mxu0 0
        %333 = vmatpush1.bf16.msra.mxu0 0
        %334 = vmatprep.subr.bf16.mxu0 0
        %335 = vmatpush1.bf16.msra.mxu0 0
        %336 = vmatprep.subr.bf16.mxu0 0
        %337 = vmatpush1.bf16.msra.mxu0 0
        %338 = vmatprep.subr.bf16.mxu0 0
        %339 = vmatpush1.bf16.msra.mxu0 0
        %340 = vmatprep.subr.bf16.mxu0 0
        %341 = vmatpush1.bf16.msra.mxu0 0
        %342 = vmatprep.subr.bf16.mxu0 0
        %343 = vmatpush1.bf16.msra.mxu0 0
        %344 = vmatprep.subr.bf16.mxu0 0
        %345 = vmatpush1.bf16.msra.mxu0 0
        %346 = vmatprep.subr.bf16.mxu0 0
        %347 = vmatpush1.bf16.msra.mxu0 0
        %348 = vmatprep.subr.bf16.mxu0 0
        %349 = vmatpush1.bf16.msra.mxu0 0
        %350 = vmatprep.subr.bf16.mxu0 0
        %351 = vmatpush1.bf16.msra.mxu0 0
        %352 = vmatprep.subr.bf16.mxu0 0
        %353 = vmatpush1.bf16.msra.mxu0 0
        %354 = vmatprep.subr.bf16.mxu0 0
        %355 = vmatpush1.bf16.msra.mxu0 0
        %356 = vmatprep.mubr.bf16.mxu0 0
        %357 = vmatmul.mubr.bf16.gmra.mrb[0].mxu0 %v281
        %v358 = vpop.f32.mrb[0].mxu0
        %v359 = vadd.f32 %v243, %v358
        %v360 = vpop.f32.mrb[0].mxu0
        %v361 = vpop.f32.mrb[0].mxu0
        %v362 = vpop.f32.mrb[0].mxu0
        %363 = vdwg.mxu0
        %v364 = vpack.c.bf16 %v318, %v318
        %v365 = vpack.c.bf16 %v320, %v320
        %v367 = vsel %vm279, %v364, 0
        %v370 = vsel %vm279, %v365, 0
        %372 = vmatprep.subr.bf16.mxu0 0
        %373 = vmatpush1.bf16.xpose.msra.mxu0 %v370
        %374 = vmatprep.subr.bf16.mxu0 0
        %375 = vmatpush1.bf16.xpose.msra.mxu0 0
        %376 = vmatprep.subr.bf16.mxu0 0
        %377 = vmatpush1.bf16.xpose.msra.mxu0 0
        %378 = vmatprep.subr.bf16.mxu0 0
        %379 = vmatpush1.bf16.xpose.msra.mxu0 0
        %380 = vmatprep.subr.bf16.mxu0 0
        %381 = vmatpush1.bf16.xpose.msra.mxu0 0
        %382 = vmatprep.subr.bf16.mxu0 0
        %383 = vmatpush1.bf16.xpose.msra.mxu0 0
        %384 = vmatprep.subr.bf16.mxu0 0
        %385 = vmatpush1.bf16.xpose.msra.mxu0 0
        %386 = vmatprep.subr.bf16.mxu0 0
        %387 = vmatpush1.bf16.xpose.msra.mxu0 0
        %388 = vmatprep.subr.bf16.mxu0 0
        %389 = vmatpush1.bf16.xpose.msra.mxu0 0
        %390 = vmatprep.subr.bf16.mxu0 0
        %391 = vmatpush1.bf16.xpose.msra.mxu0 0
        %392 = vmatprep.subr.bf16.mxu0 0
        %393 = vmatpush1.bf16.xpose.msra.mxu0 0
        %394 = vmatprep.subr.bf16.mxu0 0
        %395 = vmatpush1.bf16.xpose.msra.mxu0 0
        %396 = vmatprep.subr.bf16.mxu0 0
        %397 = vmatpush1.bf16.xpose.msra.mxu0 0
        %398 = vmatprep.subr.bf16.mxu0 0
        %399 = vmatpush1.bf16.xpose.msra.mxu0 0
        %400 = vmatprep.subr.bf16.mxu0 0
        %401 = vmatpush1.bf16.xpose.msra.mxu0 0
        %402 = vmatprep.subr.bf16.mxu0 0
        %403 = vmatpush1.bf16.xpose.msra.mxu0 0
        %404 = vmatprep.mubr.bf16.mxu0 0
        %405 = vmatmul.mubr.bf16.gmra.mrb[0].mxu0 %v367
        %v406 = vpop.f32.mrb[0].mxu0
        %v407 = vadd.f32 0.0, %v406
        %v408 = vpop.f32.mrb[0].mxu0
        %v409 = vpop.f32.mrb[0].mxu0
        %v410 = vpop.f32.mrb[0].mxu0
        %411 = vdwg.mxu0
        %v412 = vmul.f32 %v407, 0.17677669
        %vm413 = vcmask 64512
        %v414 = vsel %vm413, %v412, -inf
        %415 = vmax.xlane.f32.xlu0 %v414
        %v416 = vpop.xlane.xlu0 %415
        %v417 = vsub.f32 %v412, %v416
        %v418 = vmul.f32 %v417, 1.442695
        %v419 = vpow.pop %v418
        %v420 = vsel %vm413, %v419, 0.0
        %421 = vadd.xlane.f32.xlu0 %v420
        %v422 = vpop.xlane.xlu0 %421
        %v423 = vrcp.pop %v422
        %v424 = vmul.f32 %v419, %v423
        %v425 = vpack.c.bf16 %v424, %v424
        %v426 = vpack.c.bf16 %v359, %v359
        %v428 = vsel %vm413, %v425, 0
        %vm430 = vcmask 1043456
        %v432 = vsel %vm430, %v426, 0
        %434 = vmatprep.subr.bf16.mxu0 0
        %435 = vmatpush1.bf16.msra.mxu0 %v432
        %436 = vmatprep.subr.bf16.mxu0 0
        %437 = vmatpush1.bf16.msra.mxu0 0
        %438 = vmatprep.subr.bf16.mxu0 0
        %439 = vmatpush1.bf16.msra.mxu0 0
        %440 = vmatprep.subr.bf16.mxu0 0
        %441 = vmatpush1.bf16.msra.mxu0 0
        %442 = vmatprep.subr.bf16.mxu0 0
        %443 = vmatpush1.bf16.msra.mxu0 0
        %444 = vmatprep.subr.bf16.mxu0 0
        %445 = vmatpush1.bf16.msra.mxu0 0
        %446 = vmatprep.subr.bf16.mxu0 0
        %447 = vmatpush1.bf16.msra.mxu0 0
        %448 = vmatprep.subr.bf16.mxu0 0
        %449 = vmatpush1.bf16.msra.mxu0 0
        %450 = vmatprep.subr.bf16.mxu0 0
        %451 = vmatpush1.bf16.msra.mxu0 0
        %452 = vmatprep.subr.bf16.mxu0 0
        %453 = vmatpush1.bf16.msra.mxu0 0
        %454 = vmatprep.subr.bf16.mxu0 0
        %455 = vmatpush1.bf16.msra.mxu0 0
        %456 = vmatprep.subr.bf16.mxu0 0
        %457 = vmatpush1.bf16.msra.mxu0 0
        %458 = vmatprep.subr.bf16.mxu0 0
        %459 = vmatpush1.bf16.msra.mxu0 0
        %460 = vmatprep.subr.bf16.mxu0 0
        %461 = vmatpush1.bf16.msra.mxu0 0
        %462 = vmatprep.subr.bf16.mxu0 0
        %463 = vmatpush1.bf16.msra.mxu0 0
        %464 = vmatprep.subr.bf16.mxu0 0
        %465 = vmatpush1.bf16.msra.mxu0 0
        %466 = vmatprep.mubr.bf16.mxu0 0
        %467 = vmatmul.mubr.bf16.gmra.mrb[0].mxu0 %v428
        %v468 = vpop.f32.mrb[0].mxu0
        %v469 = vadd.f32 0.0, %v468
        %v470 = vpop.f32.mrb[0].mxu0
        %v471 = vpop.f32.mrb[0].mxu0
        %v472 = vpop.f32.mrb[0].mxu0
        %473 = vdwg.mxu0
        %v474 = vpack.c.bf16 %v469, %v469
        %476 = vrot.lane.b32.xlu0 %v364, 96
        %v477 = vpop.permute.xlu0 %476
        %479 = vrot.lane.b32.xlu0 %v365, 96
        %v480 = vpop.permute.xlu0 %479
        %v482 = vsel %vm279, %v477, 0
        %v485 = vsel %vm279, %v480, 0
        %487 = vmatprep.subr.bf16.mxu0 0
        %488 = vmatpush1.bf16.xpose.msra.mxu0 %v485
        %489 = vmatprep.subr.bf16.mxu0 0
        %490 = vmatpush1.bf16.xpose.msra.mxu0 0
        %491 = vmatprep.subr.bf16.mxu0 0
        %492 = vmatpush1.bf16.xpose.msra.mxu0 0
        %493 = vmatprep.subr.bf16.mxu0 0
        %494 = vmatpush1.bf16.xpose.msra.mxu0 0
        %495 = vmatprep.subr.bf16.mxu0 0
        %496 = vmatpush1.bf16.xpose.msra.mxu0 0
        %497 = vmatprep.subr.bf16.mxu0 0
        %498 = vmatpush1.bf16.xpose.msra.mxu0 0
        %499 = vmatprep.subr.bf16.mxu0 0
        %500 = vmatpush1.bf16.xpose.msra.mxu0 0
        %501 = vmatprep.subr.bf16.mxu0 0
        %502 = vmatpush1.bf16.xpose.msra.mxu0 0
        %503 = vmatprep.subr.bf16.mxu0 0
        %504 = vmatpush1.bf16.xpose.msra.mxu0 0
        %505 = vmatprep.subr.bf16.mxu0 0
        %506 = vmatpush1.bf16.xpose.msra.mxu0 0
        %507 = vmatprep.subr.bf16.mxu0 0
        %508 = vmatpush1.bf16.xpose.msra.mxu0 0
        %509 = vmatprep.subr.bf16.mxu0 0
        %510 = vmatpush1.bf16.xpose.msra.mxu0 0
        %511 = vmatprep.subr.bf16.mxu0 0
        %512 = vmatpush1.bf16.xpose.msra.mxu0 0
        %513 = vmatprep.subr.bf16.mxu0 0
        %514 = vmatpush1.bf16.xpose.msra.mxu0 0
        %515 = vmatprep.subr.bf16.mxu0 0
        %516 = vmatpush1.bf16.xpose.msra.mxu0 0
        %517 = vmatprep.subr.bf16.mxu0 0
        %518 = vmatpush1.bf16.xpose.msra.mxu0 0
        %519 = vmatprep.mubr.bf16.mxu0 0
        %520 = vmatmul.mubr.bf16.gmra.mrb[0].mxu0 %v482
        %v521 = vpop.f32.mrb[0].mxu0
        %v522 = vadd.f32 0.0, %v521
        %v523 = vpop.f32.mrb[0].mxu0
        %v524 = vpop.f32.mrb[0].mxu0
        %v525 = vpop.f32.mrb[0].mxu0
        %526 = vdwg.mxu0
        %v527 = vmul.f32 %v522, 0.17677669
        %v528 = vsel %vm413, %v527, -inf
        %529 = vmax.xlane.f32.xlu0 %v528
        %v530 = vpop.xlane.xlu0 %529
        %v531 = vsub.f32 %v527, %v530
        %v532 = vmul.f32 %v531, 1.442695
        %v533 = vpow.pop %v532
        %v534 = vsel %vm413, %v533, 0.0
        %535 = vadd.xlane.f32.xlu0 %v534
        %v536 = vpop.xlane.xlu0 %535
        %v537 = vrcp.pop %v536
        %v538 = vmul.f32 %v533, %v537
        %v539 = vpack.c.bf16 %v538, %v538
        %541 = vrot.lane.b32.xlu0 %v426, 96
        %v542 = vpop.permute.xlu0 %541
        %v544 = vsel %vm413, %v539, 0
        %v547 = vsel %vm430, %v542, 0
        %549 = vmatprep.subr.bf16.mxu0 0
        %550 = vmatpush1.bf16.msra.mxu0 %v547
        %551 = vmatprep.subr.bf16.mxu0 0
        %552 = vmatpush1.bf16.msra.mxu0 0
        %553 = vmatprep.subr.bf16.mxu0 0
        %554 = vmatpush1.bf16.msra.mxu0 0
        %555 = vmatprep.subr.bf16.mxu0 0
        %556 = vmatpush1.bf16.msra.mxu0 0
        %557 = vmatprep.subr.bf16.mxu0 0
        %558 = vmatpush1.bf16.msra.mxu0 0
        %559 = vmatprep.subr.bf16.mxu0 0
        %560 = vmatpush1.bf16.msra.mxu0 0
        %561 = vmatprep.subr.bf16.mxu0 0
        %562 = vmatpush1.bf16.msra.mxu0 0
        %563 = vmatprep.subr.bf16.mxu0 0
        %564 = vmatpush1.bf16.msra.mxu0 0
        %565 = vmatprep.subr.bf16.mxu0 0
        %566 = vmatpush1.bf16.msra.mxu0 0
        %567 = vmatprep.subr.bf16.mxu0 0
        %568 = vmatpush1.bf16.msra.mxu0 0
        %569 = vmatprep.subr.bf16.mxu0 0
        %570 = vmatpush1.bf16.msra.mxu0 0
        %571 = vmatprep.subr.bf16.mxu0 0
        %572 = vmatpush1.bf16.msra.mxu0 0
        %573 = vmatprep.subr.bf16.mxu0 0
        %574 = vmatpush1.bf16.msra.mxu0 0
        %575 = vmatprep.subr.bf16.mxu0 0
        %576 = vmatpush1.bf16.msra.mxu0 0
        %577 = vmatprep.subr.bf16.mxu0 0
        %578 = vmatpush1.bf16.msra.mxu0 0
        %579 = vmatprep.subr.bf16.mxu0 0
        %580 = vmatpush1.bf16.msra.mxu0 0
        %581 = vmatprep.mubr.bf16.mxu0 0
        %582 = vmatmul.mubr.bf16.gmra.mrb[0].mxu0 %v544
        %v583 = vpop.f32.mrb[0].mxu0
        %v584 = vadd.f32 0.0, %v583
        %v585 = vpop.f32.mrb[0].mxu0
        %v586 = vpop.f32.mrb[0].mxu0
        %v587 = vpop.f32.mrb[0].mxu0
        %588 = vdwg.mxu0
        %v589 = vpack.c.bf16 %v584, %v584
        %590 = vrot.lane.b32.xlu0 %v364, 64
        %v591 = vpop.permute.xlu0 %590
        %592 = vrot.lane.b32.xlu0 %v365, 64
        %v593 = vpop.permute.xlu0 %592
        %v595 = vsel %vm279, %v591, 0
        %v598 = vsel %vm279, %v593, 0
        %600 = vmatprep.subr.bf16.mxu0 0
        %601 = vmatpush1.bf16.xpose.msra.mxu0 %v598
        %602 = vmatprep.subr.bf16.mxu0 0
        %603 = vmatpush1.bf16.xpose.msra.mxu0 0
        %604 = vmatprep.subr.bf16.mxu0 0
        %605 = vmatpush1.bf16.xpose.msra.mxu0 0
        %606 = vmatprep.subr.bf16.mxu0 0
        %607 = vmatpush1.bf16.xpose.msra.mxu0 0
        %608 = vmatprep.subr.bf16.mxu0 0
        %609 = vmatpush1.bf16.xpose.msra.mxu0 0
        %610 = vmatprep.subr.bf16.mxu0 0
        %611 = vmatpush1.bf16.xpose.msra.mxu0 0
        %612 = vmatprep.subr.bf16.mxu0 0
        %613 = vmatpush1.bf16.xpose.msra.mxu0 0
        %614 = vmatprep.subr.bf16.mxu0 0
        %615 = vmatpush1.bf16.xpose.msra.mxu0 0
        %616 = vmatprep.subr.bf16.mxu0 0
        %617 = vmatpush1.bf16.xpose.msra.mxu0 0
        %618 = vmatprep.subr.bf16.mxu0 0
        %619 = vmatpush1.bf16.xpose.msra.mxu0 0
        %620 = vmatprep.subr.bf16.mxu0 0
        %621 = vmatpush1.bf16.xpose.msra.mxu0 0
        %622 = vmatprep.subr.bf16.mxu0 0
        %623 = vmatpush1.bf16.xpose.msra.mxu0 0
        %624 = vmatprep.subr.bf16.mxu0 0
        %625 = vmatpush1.bf16.xpose.msra.mxu0 0
        %626 = vmatprep.subr.bf16.mxu0 0
        %627 = vmatpush1.bf16.xpose.msra.mxu0 0
        %628 = vmatprep.subr.bf16.mxu0 0
        %629 = vmatpush1.bf16.xpose.msra.mxu0 0
        %630 = vmatprep.subr.bf16.mxu0 0
        %631 = vmatpush1.bf16.xpose.msra.mxu0 0
        %632 = vmatprep.mubr.bf16.mxu0 0
        %633 = vmatmul.mubr.bf16.gmra.mrb[0].mxu0 %v595
        %v634 = vpop.f32.mrb[0].mxu0
        %v635 = vadd.f32 0.0, %v634
        %v636 = vpop.f32.mrb[0].mxu0
        %v637 = vpop.f32.mrb[0].mxu0
        %v638 = vpop.f32.mrb[0].mxu0
        %639 = vdwg.mxu0
        %v640 = vmul.f32 %v635, 0.17677669
        %v641 = vsel %vm413, %v640, -inf
        %642 = vmax.xlane.f32.xlu0 %v641
        %v643 = vpop.xlane.xlu0 %642
        %v644 = vsub.f32 %v640, %v643
        %v645 = vmul.f32 %v644, 1.442695
        %v646 = vpow.pop %v645
        %v647 = vsel %vm413, %v646, 0.0
        %648 = vadd.xlane.f32.xlu0 %v647
        %v649 = vpop.xlane.xlu0 %648
        %v650 = vrcp.pop %v649
        %v651 = vmul.f32 %v646, %v650
        %v652 = vpack.c.bf16 %v651, %v651
        %653 = vrot.lane.b32.xlu0 %v426, 64
        %v654 = vpop.permute.xlu0 %653
        %v656 = vsel %vm413, %v652, 0
        %v659 = vsel %vm430, %v654, 0
        %661 = vmatprep.subr.bf16.mxu0 0
        %662 = vmatpush1.bf16.msra.mxu0 %v659
        %663 = vmatprep.subr.bf16.mxu0 0
        %664 = vmatpush1.bf16.msra.mxu0 0
        %665 = vmatprep.subr.bf16.mxu0 0
        %666 = vmatpush1.bf16.msra.mxu0 0
        %667 = vmatprep.subr.bf16.mxu0 0
        %668 = vmatpush1.bf16.msra.mxu0 0
        %669 = vmatprep.subr.bf16.mxu0 0
        %670 = vmatpush1.bf16.msra.mxu0 0
        %671 = vmatprep.subr.bf16.mxu0 0
        %672 = vmatpush1.bf16.msra.mxu0 0
        %673 = vmatprep.subr.bf16.mxu0 0
        %674 = vmatpush1.bf16.msra.mxu0 0
        %675 = vmatprep.subr.bf16.mxu0 0
        %676 = vmatpush1.bf16.msra.mxu0 0
        %677 = vmatprep.subr.bf16.mxu0 0
        %678 = vmatpush1.bf16.msra.mxu0 0
        %679 = vmatprep.subr.bf16.mxu0 0
        %680 = vmatpush1.bf16.msra.mxu0 0
        %681 = vmatprep.subr.bf16.mxu0 0
        %682 = vmatpush1.bf16.msra.mxu0 0
        %683 = vmatprep.subr.bf16.mxu0 0
        %684 = vmatpush1.bf16.msra.mxu0 0
        %685 = vmatprep.subr.bf16.mxu0 0
        %686 = vmatpush1.bf16.msra.mxu0 0
        %687 = vmatprep.subr.bf16.mxu0 0
        %688 = vmatpush1.bf16.msra.mxu0 0
        %689 = vmatprep.subr.bf16.mxu0 0
        %690 = vmatpush1.bf16.msra.mxu0 0
        %691 = vmatprep.subr.bf16.mxu0 0
        %692 = vmatpush1.bf16.msra.mxu0 0
        %693 = vmatprep.mubr.bf16.mxu0 0
        %694 = vmatmul.mubr.bf16.gmra.mrb[0].mxu0 %v656
        %v695 = vpop.f32.mrb[0].mxu0
        %v696 = vadd.f32 0.0, %v695
        %v697 = vpop.f32.mrb[0].mxu0
        %v698 = vpop.f32.mrb[0].mxu0
        %v699 = vpop.f32.mrb[0].mxu0
        %700 = vdwg.mxu0
        %v701 = vpack.c.bf16 %v696, %v696
        %702 = vrot.lane.b32.xlu0 %v364, 32
        %v703 = vpop.permute.xlu0 %702
        %704 = vrot.lane.b32.xlu0 %v365, 32
        %v705 = vpop.permute.xlu0 %704
        %v707 = vsel %vm279, %v703, 0
        %v710 = vsel %vm279, %v705, 0
        %712 = vmatprep.subr.bf16.mxu0 0
        %713 = vmatpush1.bf16.xpose.msra.mxu0 %v710
        %714 = vmatprep.subr.bf16.mxu0 0
        %715 = vmatpush1.bf16.xpose.msra.mxu0 0
        %716 = vmatprep.subr.bf16.mxu0 0
        %717 = vmatpush1.bf16.xpose.msra.mxu0 0
        %718 = vmatprep.subr.bf16.mxu0 0
        %719 = vmatpush1.bf16.xpose.msra.mxu0 0
        %720 = vmatprep.subr.bf16.mxu0 0
        %721 = vmatpush1.bf16.xpose.msra.mxu0 0
        %722 = vmatprep.subr.bf16.mxu0 0
        %723 = vmatpush1.bf16.xpose.msra.mxu0 0
        %724 = vmatprep.subr.bf16.mxu0 0
        %725 = vmatpush1.bf16.xpose.msra.mxu0 0
        %726 = vmatprep.subr.bf16.mxu0 0
        %727 = vmatpush1.bf16.xpose.msra.mxu0 0
        %728 = vmatprep.subr.bf16.mxu0 0
        %729 = vmatpush1.bf16.xpose.msra.mxu0 0
        %730 = vmatprep.subr.bf16.mxu0 0
        %731 = vmatpush1.bf16.xpose.msra.mxu0 0
        %732 = vmatprep.subr.bf16.mxu0 0
        %733 = vmatpush1.bf16.xpose.msra.mxu0 0
        %734 = vmatprep.subr.bf16.mxu0 0
        %735 = vmatpush1.bf16.xpose.msra.mxu0 0
        %736 = vmatprep.subr.bf16.mxu0 0
        %737 = vmatpush1.bf16.xpose.msra.mxu0 0
        %738 = vmatprep.subr.bf16.mxu0 0
        %739 = vmatpush1.bf16.xpose.msra.mxu0 0
        %740 = vmatprep.subr.bf16.mxu0 0
        %741 = vmatpush1.bf16.xpose.msra.mxu0 0
        %742 = vmatprep.subr.bf16.mxu0 0
        %743 = vmatpush1.bf16.xpose.msra.mxu0 0
        %744 = vmatprep.mubr.bf16.mxu0 0
        %745 = vmatmul.mubr.bf16.gmra.mrb[0].mxu0 %v707
        %v746 = vpop.f32.mrb[0].mxu0
        %v747 = vadd.f32 0.0, %v746
        %v748 = vpop.f32.mrb[0].mxu0
        %v749 = vpop.f32.mrb[0].mxu0
        %v750 = vpop.f32.mrb[0].mxu0
        %751 = vdwg.mxu0
        %v752 = vmul.f32 %v747, 0.17677669
        %v753 = vsel %vm413, %v752, -inf
        %754 = vmax.xlane.f32.xlu0 %v753
        %v755 = vpop.xlane.xlu0 %754
        %v756 = vsub.f32 %v752, %v755
        %v757 = vmul.f32 %v756, 1.442695
        %v758 = vpow.pop %v757
        %v759 = vsel %vm413, %v758, 0.0
        %760 = vadd.xlane.f32.xlu0 %v759
        %v761 = vpop.xlane.xlu0 %760
        %v762 = vrcp.pop %v761
        %v763 = vmul.f32 %v758, %v762
        %v764 = vpack.c.bf16 %v763, %v763
        %765 = vrot.lane.b32.xlu0 %v426, 32
        %v766 = vpop.permute.xlu0 %765
        %v768 = vsel %vm413, %v764, 0
        %v771 = vsel %vm430, %v766, 0
        %773 = vmatprep.subr.bf16.mxu0 0
        %774 = vmatpush1.bf16.msra.mxu0 %v771
        %775 = vmatprep.subr.bf16.mxu0 0
        %776 = vmatpush1.bf16.msra.mxu0 0
        %777 = vmatprep.subr.bf16.mxu0 0
        %778 = vmatpush1.bf16.msra.mxu0 0
        %779 = vmatprep.subr.bf16.mxu0 0
        %780 = vmatpush1.bf16.msra.mxu0 0
        %781 = vmatprep.subr.bf16.mxu0 0
        %782 = vmatpush1.bf16.msra.mxu0 0
        %783 = vmatprep.subr.bf16.mxu0 0
        %784 = vmatpush1.bf16.msra.mxu0 0
        %785 = vmatprep.subr.bf16.mxu0 0
        %786 = vmatpush1.bf16.msra.mxu0 0
        %787 = vmatprep.subr.bf16.mxu0 0
        %788 = vmatpush1.bf16.msra.mxu0 0
        %789 = vmatprep.subr.bf16.mxu0 0
        %790 = vmatpush1.bf16.msra.mxu0 0
        %791 = vmatprep.subr.bf16.mxu0 0
        %792 = vmatpush1.bf16.msra.mxu0 0
        %793 = vmatprep.subr.bf16.mxu0 0
        %794 = vmatpush1.bf16.msra.mxu0 0
        %795 = vmatprep.subr.bf16.mxu0 0
        %796 = vmatpush1.bf16.msra.mxu0 0
        %797 = vmatprep.subr.bf16.mxu0 0
        %798 = vmatpush1.bf16.msra.mxu0 0
        %799 = vmatprep.subr.bf16.mxu0 0
        %800 = vmatpush1.bf16.msra.mxu0 0
        %801 = vmatprep.subr.bf16.mxu0 0
        %802 = vmatpush1.bf16.msra.mxu0 0
        %803 = vmatprep.subr.bf16.mxu0 0
        %804 = vmatpush1.bf16.msra.mxu0 0
        %805 = vmatprep.mubr.bf16.mxu0 0
        %806 = vmatmul.mubr.bf16.gmra.mrb[0].mxu0 %v768
        %v807 = vpop.f32.mrb[0].mxu0
        %v808 = vadd.f32 0.0, %v807
        %v809 = vpop.f32.mrb[0].mxu0
        %v810 = vpop.f32.mrb[0].mxu0
        %v811 = vpop.f32.mrb[0].mxu0
        %812 = vdwg.mxu0
        %v813 = vpack.c.bf16 %v808, %v808
        %815 = vrot.lane.b32.xlu0 %v589, 32
        %v816 = vpop.permute.xlu0 %815
        %818 = vrot.lane.b32.xlu0 %v701, 64
        %v819 = vpop.permute.xlu0 %818
        %821 = vrot.lane.b32.xlu0 %v813, 96
        %v822 = vpop.permute.xlu0 %821
        %v825 = vsel %vm279, %v474, %v816
        %vm826 = vcmask 523264
        %v828 = vsel %vm826, %v825, %v819
        %vm829 = vcmask 785408
        %v831 = vsel %vm829, %v828, %v822
        %v833 = vld [vmem:[%s3] sm:$0xf]
        %v834 = vld [vmem:[%s3 + $0x4] sm:$0xf]
        %v835 = vld [vmem:[%s3 + $0x8] sm:$0xf]
        %v836 = vld [vmem:[%s3 + $0xc] sm:$0xf]
        %v837 = vld [vmem:[%s3 + $0x10] sm:$0xf]
        %v838 = vld [vmem:[%s3 + $0x14] sm:$0xf]
        %v839 = vld [vmem:[%s3 + $0x18] sm:$0xf]
        %v840 = vld [vmem:[%s3 + $0x1c] sm:$0xf]
        %v841 = vld [vmem:[%s3 + $0x20] sm:$0xf]
        %v842 = vld [vmem:[%s3 + $0x24] sm:$0xf]
        %v843 = vld [vmem:[%s3 + $0x28] sm:$0xf]
        %v844 = vld [vmem:[%s3 + $0x2c] sm:$0xf]
        %v845 = vld [vmem:[%s3 + $0x30] sm:$0xf]
        %v846 = vld [vmem:[%s3 + $0x34] sm:$0xf]
        %v847 = vld [vmem:[%s3 + $0x38] sm:$0xf]
        %v848 = vld [vmem:[%s3 + $0x3c] sm:$0xf]
        %v849 = vld [vmem:[%s4] sm:$0x1]
        %v851 = vlaneseq
        %v852 = vshrl.u32 %v851, 7
        %v853 = vsub.s32 0, %v852
        %v854 = vrot.slane %v849, %v853
        %v872 = vunpack.c.l.b16 %v833
        %v873 = vunpack.c.l.b16 %v834
        %v874 = vunpack.c.l.b16 %v835
        %v875 = vunpack.c.l.b16 %v836
        %v876 = vunpack.c.l.b16 %v837
        %v877 = vunpack.c.l.b16 %v838
        %v878 = vunpack.c.l.b16 %v839
        %v879 = vunpack.c.l.b16 %v840
        %v880 = vunpack.c.l.b16 %v841
        %v881 = vunpack.c.l.b16 %v842
        %v882 = vunpack.c.l.b16 %v843
        %v883 = vunpack.c.l.b16 %v844
        %v884 = vunpack.c.l.b16 %v845
        %v885 = vunpack.c.l.b16 %v846
        %v886 = vunpack.c.l.b16 %v847
        %v887 = vunpack.c.l.b16 %v848
        %v888 = vpack.c.b16 %v873, %v872
        %v889 = vpack.c.b16 %v875, %v874
        %v890 = vpack.c.b16 %v877, %v876
        %v891 = vpack.c.b16 %v879, %v878
        %v892 = vpack.c.b16 %v881, %v880
        %v893 = vpack.c.b16 %v883, %v882
        %v894 = vpack.c.b16 %v885, %v884
        %v895 = vpack.c.b16 %v887, %v886
        %904 = vmatprep.subr.bf16.mxu0 0
        %905 = vmatpush1.bf16.msra.mxu0 %v888
        %906 = vmatprep.subr.bf16.mxu0 0
        %907 = vmatpush1.bf16.msra.mxu0 %v889
        %908 = vmatprep.subr.bf16.mxu0 0
        %909 = vmatpush1.bf16.msra.mxu0 %v890
        %910 = vmatprep.subr.bf16.mxu0 0
        %911 = vmatpush1.bf16.msra.mxu0 %v891
        %912 = vmatprep.subr.bf16.mxu0 0
        %913 = vmatpush1.bf16.msra.mxu0 %v892
        %914 = vmatprep.subr.bf16.mxu0 0
        %915 = vmatpush1.bf16.msra.mxu0 %v893
        %916 = vmatprep.subr.bf16.mxu0 0
        %917 = vmatpush1.bf16.msra.mxu0 %v894
        %918 = vmatprep.subr.bf16.mxu0 0
        %919 = vmatpush1.bf16.msra.mxu0 %v895
        %920 = vmatprep.subr.bf16.mxu0 0
        %921 = vmatpush1.bf16.msra.mxu0 0
        %922 = vmatprep.subr.bf16.mxu0 0
        %923 = vmatpush1.bf16.msra.mxu0 0
        %924 = vmatprep.subr.bf16.mxu0 0
        %925 = vmatpush1.bf16.msra.mxu0 0
        %926 = vmatprep.subr.bf16.mxu0 0
        %927 = vmatpush1.bf16.msra.mxu0 0
        %928 = vmatprep.subr.bf16.mxu0 0
        %929 = vmatpush1.bf16.msra.mxu0 0
        %930 = vmatprep.subr.bf16.mxu0 0
        %931 = vmatpush1.bf16.msra.mxu0 0
        %932 = vmatprep.subr.bf16.mxu0 0
        %933 = vmatpush1.bf16.msra.mxu0 0
        %934 = vmatprep.subr.bf16.mxu0 0
        %935 = vmatpush1.bf16.msra.mxu0 0
        %936 = vmatprep.mubr.bf16.mxu0 0
        %937 = vmatmul.mubr.bf16.gmra.mrb[0].mxu0 %v831
        %v938 = vpop.f32.mrb[0].mxu0
        %v939 = vadd.f32 %v854, %v938
        %v940 = vpop.f32.mrb[0].mxu0
        %v941 = vpop.f32.mrb[0].mxu0
        %v942 = vpop.f32.mrb[0].mxu0
        %943 = vdwg.mxu0
        %944 = vst.msk [vmem:[%s215] sm:$0xff] %vm279, %v939
        %s945 = sand.u32 %s137, 1
        %s946 = scalar_lea.sflag [#allocation3], %s945
        %s947 = sand.u32 %s137, 1
        %s948 = smul.addr %s947, 8
        %s949 = scalar_lea.vmem [#allocation2], %s948
        // Predicated region
        $region41: #{tpu_custom_call.1} parent=39 // pred_check
          %p950 = pneg %p147
        $region42: #{tpu_custom_call.1} parent=39 // pred_check_branch
          %952 = sbr.rel (%p950) target = $region44
        $region43: #{tpu_custom_call.1} parent=39 // pred_region
          %s954 = ssub.s32 128, 128
          %955 = vsyncadd %s946, %s954
          %s956 = smul.addr %s19, 128
          %s957 = scalar_lea.hbm %s5, %s956
          %s959 = sshll.u32 %s949, 4
          %s960 = int_to_ptr.vmem [resolvable:$true] %s959
          %962 = dma.vmem_to_hbm [thread:$0]  %s960, 128, %s957, %s946
        $region44: #{tpu_custom_call.1} parent=39 // pred_fallthru
          _
      $region40: #{tpu_custom_call.1} parent=5 // pred_fallthru
        _
      %p963 = scmp.le.s32.totalorder 2, %s14
      // Predicated region
      $region45: #{tpu_custom_call.1} parent=5 // pred_check
        %p964 = pneg %p963
      $region46: #{tpu_custom_call.1} parent=5 // pred_check_branch
        %966 = sbr.rel (%p964) target = $region48
      $region47: #{tpu_custom_call.1} parent=5 // pred_region
        %s967 = ssub.s32 %s14, 2
        // Predicated region
        $region49: #{tpu_custom_call.1} parent=47 // pred_check
          %p968 = pneg %p153
        $region50: #{tpu_custom_call.1} parent=47 // pred_check_branch
          %970 = sbr.rel (%p968) target = $region52
        $region51: #{tpu_custom_call.1} parent=47 // pred_region
          %s971 = sand.u32 %s138, 1
          %s972 = scalar_lea.sflag [#allocation3], %s971
          %s973 = sand.u32 %s138, 1
          %s974 = smul.addr %s973, 8
          %s975 = scalar_lea.vmem [#allocation2], %s974
          %976 = dma.done %s972, 128
        $region52: #{tpu_custom_call.1} parent=47 // pred_fallthru
          _
      $region48: #{tpu_custom_call.1} parent=5 // pred_fallthru
        _
    $region6: #{tpu_custom_call.1} parent=1 // loop_footer
      %s18 = sadd.s32 1, %s14
    $region7: #{tpu_custom_call.1} parent=1 // loop_footer_branch
      %13 = sbr.rel target = $region3
    $region8: #{tpu_custom_call.1} parent=1 // loop_exit
      _
    %977 = vsyncpa [#allocation3], 1
    %s978 = scalar_lea.sflag [#allocation3], 1
    %979 = vsyncpa %s978, 1

</llo_original>
